<compile_context>
chip_gen: v6e
topology: v6e:2x2x1
jax: 0.10.0
libtpu: 0.0.40
codegen_flags: <defaults>
</compile_context>

<pallas_src>
import functools

import jax
import jax.numpy as jnp
from jax.experimental import pallas as pl
from jax.experimental.pallas import tpu as pltpu


def _silu_f32(x):
    return x * jax.nn.sigmoid(x)


# ---------------------------------------------------------------------------
# Stage 1 kernel: class-invariant MLP over the embedding table.
#   out_table[c, :] = silu(table[c, :] @ W1 + b1) @ W2 + b2
# ---------------------------------------------------------------------------
def _table_mlp_kernel(table_ref, w1_ref, b1_ref, w2_ref, b2_ref, o_ref):
    emb = table_ref[...]                                            # (TC, D), native dtype
    h = jnp.dot(emb, w1_ref[...], preferred_element_type=jnp.float32)
    h = h + b1_ref[...].astype(jnp.float32)
    h = _silu_f32(h)                                                # elementwise in f32 (v5e-safe)
    h = h.astype(w2_ref.dtype)                                      # bf16 weights -> bf16 operand
    out = jnp.dot(h, w2_ref[...], preferred_element_type=jnp.float32)
    out = out + b2_ref[...].astype(jnp.float32)
    o_ref[...] = out.astype(o_ref.dtype)


# ---------------------------------------------------------------------------
# Stage 2 kernel: per batch tile, gather rows of the precomputed output table
# as an MXU matmul:  one_hot(labels) @ out_table.
# ---------------------------------------------------------------------------
def _gather_kernel(labels_ref, out_table_ref, o_ref, *, num_classes_padded):
    tb = labels_ref.shape[0]
    labels = labels_ref[...]                                        # (TB, 1) int32
    class_ids = jax.lax.broadcasted_iota(jnp.int32, (tb, num_classes_padded), 1)
    onehot = (class_ids == labels).astype(out_table_ref.dtype)      # (TB, Ncls_p)
    o_ref[...] = jnp.dot(onehot, out_table_ref[...],
                         preferred_element_type=jnp.float32).astype(o_ref.dtype)


# ---------------------------------------------------------------------------
# Batch-tile heuristic: big (>=128, up to 512) lane-aligned tiles for real
# batches, capped so large batches keep >=2 grid steps (v7x megacore sharding);
# tiny batches get a single sublane-aligned tile with no huge padding.
# ---------------------------------------------------------------------------
def _pick_tile_b(batch):
    if batch >= 1024:
        return 512
    if batch >= 512:
        return 256
    if batch >= 256:
        return 128
    return min(128, pl.cdiv(batch, 8) * 8)


def class_embedding_forward(class_labels, params, *, tile_b=None, tile_c=None):
    table = params["embedding"]                                     # (Ncls, D)
    w1, b1 = params["w1"], params["b1"]                             # (D, D), (D,)
    w2, b2 = params["w2"], params["b2"]
    num_classes, emb_dim = table.shape

    # Pad class axis to a multiple of 128: lane-dense one-hot K dimension and
    # sublane-aligned table rows. Padded rows are zero and never selected.
    ncp = pl.cdiv(num_classes, 128) * 128
    table_p = jnp.pad(table, ((0, ncp - num_classes), (0, 0)))

    # ---- Stage 1: precompute the class -> output table (tiny, done once) ----
    if tile_c is None:
        tile_c = min(ncp, 512)
    while ncp % tile_c:                                             # ncp % 128 == 0, terminates >=128
        tile_c //= 2
    nc = ncp // tile_c

    out_table = pl.pallas_call(
        _table_mlp_kernel,
        out_shape=jax.ShapeDtypeStruct((ncp, emb_dim), table.dtype),
        grid_spec=pltpu.PrefetchScalarGridSpec(
            num_scalar_prefetch=0,
            grid=(nc,),
            in_specs=[
                pl.BlockSpec((tile_c, emb_dim), lambda i: (i, 0)),   # table tile
                pl.BlockSpec((emb_dim, emb_dim), lambda i: (0, 0)),  # W1 (resident)
                pl.BlockSpec((1, emb_dim), lambda i: (0, 0)),        # b1
                pl.BlockSpec((emb_dim, emb_dim), lambda i: (0, 0)),  # W2 (resident)
                pl.BlockSpec((1, emb_dim), lambda i: (0, 0)),        # b2
            ],
            out_specs=pl.BlockSpec((tile_c, emb_dim), lambda i: (i, 0)),
        ),
        compiler_params=pltpu.CompilerParams(
            dimension_semantics=("parallel",)),
        # NOTE: at emb_dim >= 2048 with f32 weights, raise vmem_limit_bytes here.
    )(table_p, w1, b1.reshape(1, emb_dim), w2, b2.reshape(1, emb_dim))

    # ---- Stage 2: bandwidth-bound batched lookup -----------------------------
    orig_shape = class_labels.shape
    flat = class_labels.reshape(-1).astype(jnp.int32)
    batch = flat.shape[0]
    if tile_b is None:
        tile_b = _pick_tile_b(batch)
    batch_p = pl.cdiv(batch, tile_b) * tile_b
    flat = jnp.pad(flat, (0, batch_p - batch))
    nb = batch_p // tile_b

    kernel = functools.partial(_gather_kernel, num_classes_padded=ncp)
    out = pl.pallas_call(
        kernel,
        out_shape=jax.ShapeDtypeStruct((batch_p, emb_dim), table.dtype),
        grid_spec=pltpu.PrefetchScalarGridSpec(
            num_scalar_prefetch=0,
            grid=(nb,),
            in_specs=[
                pl.BlockSpec((tile_b, 1), lambda i: (i, 0)),         # labels tile
                pl.BlockSpec((ncp, emb_dim), lambda i: (0, 0)),      # out_table (resident)
            ],
            out_specs=pl.BlockSpec((tile_b, emb_dim), lambda i: (i, 0)),
        ),
        compiler_params=pltpu.CompilerParams(
            dimension_semantics=("parallel",)),
    )(flat.reshape(batch_p, 1), out_table)

    return out[:batch].reshape(*orig_shape, emb_dim)


# ---------------------------------------------------------------------------
# Pure-JAX reference (matches the PyTorch module semantics) for verification.
# ---------------------------------------------------------------------------
def ref_forward(class_labels, params):
    emb = params["embedding"][class_labels]
    h = jnp.dot(emb, params["w1"]) + params["b1"]
    h = _silu_f32(h)
    return jnp.dot(h, params["w2"]) + params["b2"]


if __name__ == "__main__":
    num_classes, embedding_dim, batch = 10, 128, 16

    key = jax.random.PRNGKey(0)
    k_emb, k_w1, k_b1, k_w2, k_b2, k_lab = jax.random.split(key, 6)
    f32 = jnp.float32

    # Linear weights stored as (in, out): y = x @ W + b (same math as nn.Linear).
    params = {
        "embedding": 0.2 * jax.random.normal(k_emb, (num_classes, embedding_dim), f32),
        "w1": 0.2 * jax.random.normal(k_w1, (embedding_dim, embedding_dim), f32),
        "b1": 0.1 * jax.random.normal(k_b1, (embedding_dim,), f32),
        "w2": 0.2 * jax.random.normal(k_w2, (embedding_dim, embedding_dim), f32),
        "b2": 0.1 * jax.random.normal(k_b2, (embedding_dim,), f32),
    }
    class_labels = jax.random.randint(k_lab, (batch,), 0, num_classes, dtype=jnp.int32)

    out = class_embedding_forward(class_labels, params)
    out = jax.block_until_ready(out)

    ref = jax.block_until_ready(ref_forward(class_labels, params))

    assert out.shape == (batch, embedding_dim)
    if not jnp.allclose(out, ref, atol=1e-4, rtol=1e-4):
        raise AssertionError("Pallas ClassEmbedding does not match reference")
    print("KERNEL_OK")
</pallas_src>

<mosaic_0001>
module attributes {stable_mosaic.version = 11 : i64} {
  func.func @_table_mlp_kernel(%arg0: i32, %arg1: memref<128x128xf32, #tpu.memory_space<vmem>>, %arg2: memref<128x128xf32, #tpu.memory_space<vmem>>, %arg3: memref<1x128xf32, #tpu.memory_space<vmem>>, %arg4: memref<128x128xf32, #tpu.memory_space<vmem>>, %arg5: memref<1x128xf32, #tpu.memory_space<vmem>>, %arg6: memref<128x128xf32, #tpu.memory_space<vmem>>) attributes {dimension_semantics = [#tpu.dimension_semantics<parallel>], iteration_bounds = array<i64: 1>, scalar_prefetch = 0 : i64, scratch_operands = 0 : i64, tpu.core_type = #tpu.core_type<tc>, window_params = [{transform_indices = @transform_0, window_bounds = array<i64: 128, 128>}, {pipeline_mode = #tpu.pipeline_mode<synchronous>, transform_indices = @transform_1, window_bounds = array<i64: 128, 128>}, {pipeline_mode = #tpu.pipeline_mode<synchronous>, transform_indices = @transform_2, window_bounds = array<i64: 1, 128>}, {pipeline_mode = #tpu.pipeline_mode<synchronous>, transform_indices = @transform_3, window_bounds = array<i64: 128, 128>}, {pipeline_mode = #tpu.pipeline_mode<synchronous>, transform_indices = @transform_4, window_bounds = array<i64: 1, 128>}, {transform_indices = @transform_5, window_bounds = array<i64: 128, 128>}]} {
    %c0 = arith.constant 0 : index
    %c0_0 = arith.constant 0 : index
    %0 = vector.load %arg1[%c0, %c0_0] : memref<128x128xf32, #tpu.memory_space<vmem>>, vector<128x128xf32>
    %c0_1 = arith.constant 0 : index
    %c0_2 = arith.constant 0 : index
    %1 = vector.load %arg2[%c0_1, %c0_2] : memref<128x128xf32, #tpu.memory_space<vmem>>, vector<128x128xf32>
    %cst = arith.constant dense<0.000000e+00> : vector<128x128xf32>
    %2 = tpu.matmul %0, %1, %cst {dimension_numbers = #tpu.dot_dimension_numbers<[1], [0], [0], [1], [0, 0, 1, 1], [], []>} : vector<128x128xf32>, vector<128x128xf32>, vector<128x128xf32> -> vector<128x128xf32>
    %c0_3 = arith.constant 0 : index
    %c0_4 = arith.constant 0 : index
    %3 = vector.load %arg3[%c0_3, %c0_4] : memref<1x128xf32, #tpu.memory_space<vmem>>, vector<1x128xf32>
    %4 = vector.broadcast %3 : vector<1x128xf32> to vector<128x128xf32>
    %5 = arith.addf %2, %4 : vector<128x128xf32>
    %6 = arith.negf %5 : vector<128x128xf32>
    %7 = math.exp %6 : vector<128x128xf32>
    %cst_5 = arith.constant 1.000000e+00 : f32
    %8 = vector.broadcast %cst_5 : f32 to vector<128x128xf32>
    %9 = arith.addf %8, %7 : vector<128x128xf32>
    %10 = arith.divf %8, %9 : vector<128x128xf32>
    %11 = arith.mulf %5, %10 : vector<128x128xf32>
    %c0_6 = arith.constant 0 : index
    %c0_7 = arith.constant 0 : index
    %12 = vector.load %arg4[%c0_6, %c0_7] : memref<128x128xf32, #tpu.memory_space<vmem>>, vector<128x128xf32>
    %cst_8 = arith.constant dense<0.000000e+00> : vector<128x128xf32>
    %13 = tpu.matmul %11, %12, %cst_8 {dimension_numbers = #tpu.dot_dimension_numbers<[1], [0], [0], [1], [0, 0, 1, 1], [], []>} : vector<128x128xf32>, vector<128x128xf32>, vector<128x128xf32> -> vector<128x128xf32>
    %c0_9 = arith.constant 0 : index
    %c0_10 = arith.constant 0 : index
    %14 = vector.load %arg5[%c0_9, %c0_10] : memref<1x128xf32, #tpu.memory_space<vmem>>, vector<1x128xf32>
    %15 = vector.broadcast %14 : vector<1x128xf32> to vector<128x128xf32>
    %16 = arith.addf %13, %15 : vector<128x128xf32>
    %c0_11 = arith.constant 0 : index
    %c0_12 = arith.constant 0 : index
    %17 = vector.load %arg6[%c0_11, %c0_12] : memref<128x128xf32, #tpu.memory_space<vmem>>, vector<128x128xf32>
    tpu.vector_store %arg6[%c0_11, %c0_12], %16 {strides = array<i32>} : memref<128x128xf32, #tpu.memory_space<vmem>>, vector<128x128xf32>,
    return
  }
  func.func @transform_0(%arg0: i32) -> (i32, i32) {
    %c0_i32 = arith.constant 0 : i32
    %c0_i32_0 = arith.constant 0 : i32
    return %arg0, %c0_i32 : i32, i32
  }
  func.func @transform_1(%arg0: i32) -> (i32, i32) {
    %c0_i32 = arith.constant 0 : i32
    %c0_i32_0 = arith.constant 0 : i32
    %c0_i32_1 = arith.constant 0 : i32
    return %c0_i32, %c0_i32_0 : i32, i32
  }
  func.func @transform_2(%arg0: i32) -> (i32, i32) {
    %c0_i32 = arith.constant 0 : i32
    %c0_i32_0 = arith.constant 0 : i32
    %c0_i32_1 = arith.constant 0 : i32
    return %c0_i32, %c0_i32_0 : i32, i32
  }
  func.func @transform_3(%arg0: i32) -> (i32, i32) {
    %c0_i32 = arith.constant 0 : i32
    %c0_i32_0 = arith.constant 0 : i32
    %c0_i32_1 = arith.constant 0 : i32
    return %c0_i32, %c0_i32_0 : i32, i32
  }
  func.func @transform_4(%arg0: i32) -> (i32, i32) {
    %c0_i32 = arith.constant 0 : i32
    %c0_i32_0 = arith.constant 0 : i32
    %c0_i32_1 = arith.constant 0 : i32
    return %c0_i32, %c0_i32_0 : i32, i32
  }
  func.func @transform_5(%arg0: i32) -> (i32, i32) {
    %c0_i32 = arith.constant 0 : i32
    %c0_i32_0 = arith.constant 0 : i32
    return %arg0, %c0_i32 : i32, i32
  }
}

</mosaic_0001>

<llo_original>
// kernel: tpu_custom_call.1
$region0: #{tpu_custom_call.1}
  #allocation0 [shape = 'u32[]', space=smem, size = 0x4, offset = 0x4, fixed_abs, tag = 'smem constant byte address 0x4 - core index']
  #allocation1 [shape = 'u32[144,128]{1,0:T(1,128)}', space=vmem, size = 0x12000, scoped, tag = 'internal scratch']
  %s0 = inlined_call_operand.hbm [shape: f32[128,128], index: 0, kind: input, shape index: {}]
  %s1 = inlined_call_operand.hbm [shape: f32[128,128], index: 1, kind: input, shape index: {}]
  %s2 = inlined_call_operand.vmem [shape: f32[1,128], index: 2, kind: input, shape index: {}]
  %s3 = inlined_call_operand.hbm [shape: f32[128,128], index: 3, kind: input, shape index: {}]
  %s4 = inlined_call_operand.vmem [shape: f32[1,128], index: 4, kind: input, shape index: {}]
  %s5 = inlined_call_operand.hbm [shape: f32[128,128], index: 5, kind: output, shape index: {}]
  %s6 = sld [smem:[#allocation0]]
  $region42: #{tpu_custom_call.1} parent=0
    _
  %s8 = ssub.s32 1, %s6
  %s9 = scalar_select 0, %s8, %s6
  $region1: #{tpu_custom_call.1} parent=0
    #allocation2 [shape = 'u8[65536]{0}', space=vmem, size = 0x10000, scoped, tag = 'input window, operand 0, single buffered']
    #allocation3 [shape = 's32[1]{0}', space=sflag, size = 0x4, scoped, tag = 'scoped memory for tpu_custom_call.1']
    #allocation4 [shape = 's32[1]{0}', space=sflag, size = 0x4, scoped, tag = 'scoped memory for tpu_custom_call.1']
    #allocation5 [shape = 'u8[65536]{0}', space=vmem, size = 0x10000, scoped, tag = 'input window, operand 1, single buffered']
    #allocation6 [shape = 's32[1]{0}', space=sflag, size = 0x4, scoped, tag = 'scoped memory for tpu_custom_call.1']
    #allocation7 [shape = 'u8[65536]{0}', space=vmem, size = 0x10000, scoped, tag = 'input window, operand 3, single buffered']
    #allocation8 [shape = 'u8[65536]{0}', space=vmem, size = 0x10000, scoped, tag = 'output window, operand 0, single buffered']
    %10 = vsyncpa [#allocation3], 0
    %11 = vsyncpa [#allocation6], 0
    %12 = vsyncpa [#allocation4], 0
    // Predicated region
    $region2: #{tpu_custom_call.1} parent=1 // pred_check
      _
    $region3: #{tpu_custom_call.1} parent=1 // pred_check_branch
      %14 = sbr.rel (0) target = $region5
    $region4: #{tpu_custom_call.1} parent=1 // pred_region
      %s16 = ssub.s32 2048, 2048
      %17 = vsyncadd [#allocation3], %s16
      %s18 = sshll.u32 [#allocation2], 4
      %s19 = int_to_ptr.vmem [resolvable:$true] %s18
      %24 = dma.hbm_to_vmem [thread:$0]  %s0, 2048, %s19, [#allocation3], 128, 128, 8
    $region5: #{tpu_custom_call.1} parent=1 // pred_fallthru
      _
    // Predicated region
    $region6: #{tpu_custom_call.1} parent=1 // pred_check
      _
    $region7: #{tpu_custom_call.1} parent=1 // pred_check_branch
      %26 = sbr.rel (0) target = $region9
    $region8: #{tpu_custom_call.1} parent=1 // pred_region
      %s28 = ssub.s32 2048, 2048
      %29 = vsyncadd [#allocation6], %s28
      %s30 = sshll.u32 [#allocation5], 4
      %s31 = int_to_ptr.vmem [resolvable:$true] %s30
      %36 = dma.hbm_to_vmem [thread:$0]  %s1, 2048, %s31, [#allocation6], 128, 128, 8
    $region9: #{tpu_custom_call.1} parent=1 // pred_fallthru
      _
    // Predicated region
    $region10: #{tpu_custom_call.1} parent=1 // pred_check
      _
    $region11: #{tpu_custom_call.1} parent=1 // pred_check_branch
      %38 = sbr.rel (0) target = $region13
    $region12: #{tpu_custom_call.1} parent=1 // pred_region
      _
    $region13: #{tpu_custom_call.1} parent=1 // pred_fallthru
      _
    // Predicated region
    $region14: #{tpu_custom_call.1} parent=1 // pred_check
      _
    $region15: #{tpu_custom_call.1} parent=1 // pred_check_branch
      %40 = sbr.rel (0) target = $region17
    $region16: #{tpu_custom_call.1} parent=1 // pred_region
      %s42 = ssub.s32 2048, 2048
      %43 = vsyncadd [#allocation6], %s42
      %s44 = sshll.u32 [#allocation7], 4
      %s45 = int_to_ptr.vmem [resolvable:$true] %s44
      %50 = dma.hbm_to_vmem [thread:$0]  %s3, 2048, %s45, [#allocation6], 128, 128, 8
    $region17: #{tpu_custom_call.1} parent=1 // pred_fallthru
      _
    // Predicated region
    $region18: #{tpu_custom_call.1} parent=1 // pred_check
      _
    $region19: #{tpu_custom_call.1} parent=1 // pred_check_branch
      %52 = sbr.rel (0) target = $region21
    $region20: #{tpu_custom_call.1} parent=1 // pred_region
      _
    $region21: #{tpu_custom_call.1} parent=1 // pred_fallthru
      _
    // Predicated region
    $region22: #{tpu_custom_call.1} parent=1 // pred_check
      _
    $region23: #{tpu_custom_call.1} parent=1 // pred_check_branch
      %54 = sbr.rel (0) target = $region25
    $region24: #{tpu_custom_call.1} parent=1 // pred_region
      %55 = dma.done [#allocation3], 2048
    $region25: #{tpu_custom_call.1} parent=1 // pred_fallthru
      _
    // Predicated region
    $region26: #{tpu_custom_call.1} parent=1 // pred_check
      _
    $region27: #{tpu_custom_call.1} parent=1 // pred_check_branch
      %57 = sbr.rel (0) target = $region29
    $region28: #{tpu_custom_call.1} parent=1 // pred_region
      %58 = dma.done [#allocation6], 2048
    $region29: #{tpu_custom_call.1} parent=1 // pred_fallthru
      _
    // Predicated region
    $region30: #{tpu_custom_call.1} parent=1 // pred_check
      _
    $region31: #{tpu_custom_call.1} parent=1 // pred_check_branch
      %60 = sbr.rel (0) target = $region33
    $region32: #{tpu_custom_call.1} parent=1 // pred_region
      %61 = dma.done [#allocation6], 2048
    $region33: #{tpu_custom_call.1} parent=1 // pred_fallthru
      _
    %v62 = vld [vmem:[#allocation2] sm:$0xff]
    %v63 = vld [vmem:[#allocation2 + $0x8] sm:$0xff]
    %v64 = vld [vmem:[#allocation2 + $0x10] sm:$0xff]
    %v65 = vld [vmem:[#allocation2 + $0x18] sm:$0xff]
    %v66 = vld [vmem:[#allocation2 + $0x20] sm:$0xff]
    %v67 = vld [vmem:[#allocation2 + $0x28] sm:$0xff]
    %v68 = vld [vmem:[#allocation2 + $0x30] sm:$0xff]
    %v69 = vld [vmem:[#allocation2 + $0x38] sm:$0xff]
    %v70 = vld [vmem:[#allocation2 + $0x40] sm:$0xff]
    %v71 = vld [vmem:[#allocation2 + $0x48] sm:$0xff]
    %v72 = vld [vmem:[#allocation2 + $0x50] sm:$0xff]
    %v73 = vld [vmem:[#allocation2 + $0x58] sm:$0xff]
    %v74 = vld [vmem:[#allocation2 + $0x60] sm:$0xff]
    %v75 = vld [vmem:[#allocation2 + $0x68] sm:$0xff]
    %v76 = vld [vmem:[#allocation2 + $0x70] sm:$0xff]
    %v77 = vld [vmem:[#allocation2 + $0x78] sm:$0xff]
    %v78 = vld [vmem:[#allocation5] sm:$0xff]
    %v79 = vld [vmem:[#allocation5 + $0x8] sm:$0xff]
    %v80 = vld [vmem:[#allocation5 + $0x10] sm:$0xff]
    %v81 = vld [vmem:[#allocation5 + $0x18] sm:$0xff]
    %v82 = vld [vmem:[#allocation5 + $0x20] sm:$0xff]
    %v83 = vld [vmem:[#allocation5 + $0x28] sm:$0xff]
    %v84 = vld [vmem:[#allocation5 + $0x30] sm:$0xff]
    %v85 = vld [vmem:[#allocation5 + $0x38] sm:$0xff]
    %v86 = vld [vmem:[#allocation5 + $0x40] sm:$0xff]
    %v87 = vld [vmem:[#allocation5 + $0x48] sm:$0xff]
    %v88 = vld [vmem:[#allocation5 + $0x50] sm:$0xff]
    %v89 = vld [vmem:[#allocation5 + $0x58] sm:$0xff]
    %v90 = vld [vmem:[#allocation5 + $0x60] sm:$0xff]
    %v91 = vld [vmem:[#allocation5 + $0x68] sm:$0xff]
    %v92 = vld [vmem:[#allocation5 + $0x70] sm:$0xff]
    %v93 = vld [vmem:[#allocation5 + $0x78] sm:$0xff]
    %v94 = vld [vmem:[%s2] sm:$0x1]
    %v96 = vlaneseq
    %v97 = vshrl.u32 %v96, 7
    %v98 = vsub.s32 0, %v97
    %v99 = vrot.slane %v94, %v98
    %101 = vmatprep.subr.mxu0 0.0
    %102 = vmatpush1.msra.mxu0 %v93
    %103 = vmatprep.subr.mxu0 0.0
    %104 = vmatpush1.msra.mxu0 %v92
    %105 = vmatprep.subr.mxu0 0.0
    %106 = vmatpush1.msra.mxu0 %v91
    %107 = vmatprep.subr.mxu0 0.0
    %108 = vmatpush1.msra.mxu0 %v90
    %109 = vmatprep.subr.mxu0 0.0
    %110 = vmatpush1.msra.mxu0 %v89
    %111 = vmatprep.subr.mxu0 0.0
    %112 = vmatpush1.msra.mxu0 %v88
    %113 = vmatprep.subr.mxu0 0.0
    %114 = vmatpush1.msra.mxu0 %v87
    %115 = vmatprep.subr.mxu0 0.0
    %116 = vmatpush1.msra.mxu0 %v86
    %117 = vmatprep.subr.mxu0 0.0
    %118 = vmatpush1.msra.mxu0 %v85
    %119 = vmatprep.subr.mxu0 0.0
    %120 = vmatpush1.msra.mxu0 %v84
    %121 = vmatprep.subr.mxu0 0.0
    %122 = vmatpush1.msra.mxu0 %v83
    %123 = vmatprep.subr.mxu0 0.0
    %124 = vmatpush1.msra.mxu0 %v82
    %125 = vmatprep.subr.mxu0 0.0
    %126 = vmatpush1.msra.mxu0 %v81
    %127 = vmatprep.subr.mxu0 0.0
    %128 = vmatpush1.msra.mxu0 %v80
    %129 = vmatprep.subr.mxu0 0.0
    %130 = vmatpush1.msra.mxu0 %v79
    %131 = vmatprep.subr.mxu0 0.0
    %132 = vmatpush1.msra.mxu0 %v78
    %133 = vmatprep.subr.mxu0 0.0
    %134 = vmatpush2.msra.mxu0 0.0
    %135 = vmatprep.subr.mxu0 0.0
    %136 = vmatpush2.msra.mxu0 0.0
    %137 = vmatprep.subr.mxu0 0.0
    %138 = vmatpush2.msra.mxu0 0.0
    %139 = vmatprep.subr.mxu0 0.0
    %140 = vmatpush2.msra.mxu0 0.0
    %141 = vmatprep.subr.mxu0 0.0
    %142 = vmatpush2.msra.mxu0 0.0
    %143 = vmatprep.subr.mxu0 0.0
    %144 = vmatpush2.msra.mxu0 0.0
    %145 = vmatprep.subr.mxu0 0.0
    %146 = vmatpush2.msra.mxu0 0.0
    %147 = vmatprep.subr.mxu0 0.0
    %148 = vmatpush2.msra.mxu0 0.0
    %149 = vmatprep.subr.mxu0 0.0
    %150 = vmatpush2.msra.mxu0 0.0
    %151 = vmatprep.subr.mxu0 0.0
    %152 = vmatpush2.msra.mxu0 0.0
    %153 = vmatprep.subr.mxu0 0.0
    %154 = vmatpush2.msra.mxu0 0.0
    %155 = vmatprep.subr.mxu0 0.0
    %156 = vmatpush2.msra.mxu0 0.0
    %157 = vmatprep.subr.mxu0 0.0
    %158 = vmatpush2.msra.mxu0 0.0
    %159 = vmatprep.subr.mxu0 0.0
    %160 = vmatpush2.msra.mxu0 0.0
    %161 = vmatprep.subr.mxu0 0.0
    %162 = vmatpush2.msra.mxu0 0.0
    %163 = vmatprep.subr.mxu0 0.0
    %164 = vmatpush2.msra.mxu0 0.0
    %165 = vmatprep.mubr.f32.mxu0 0.0
    %166 = vmatmul.mubr.f32.gmra.mxu0 %v62
    %v167 = vpop.f32.mrf.mxu0
    %v168 = vadd.f32 %v99, %v167
    %v169 = vpop.f32.mrf.mxu0
    %170 = vmatprep.mubr.f32.mxu0 0.0
    %171 = vmatmul.mubr.f32.gmra.mxu0 %v63
    %v172 = vpop.f32.mrf.mxu0
    %v173 = vadd.f32 %v99, %v172
    %v174 = vpop.f32.mrf.mxu0
    %175 = vmatprep.mubr.f32.mxu0 0.0
    %176 = vmatmul.mubr.f32.gmra.mxu0 %v64
    %v177 = vpop.f32.mrf.mxu0
    %v178 = vadd.f32 %v99, %v177
    %v179 = vpop.f32.mrf.mxu0
    %180 = vmatprep.mubr.f32.mxu0 0.0
    %181 = vmatmul.mubr.f32.gmra.mxu0 %v65
    %v182 = vpop.f32.mrf.mxu0
    %v183 = vadd.f32 %v99, %v182
    %v184 = vpop.f32.mrf.mxu0
    %185 = vmatprep.mubr.f32.mxu0 0.0
    %186 = vmatmul.mubr.f32.gmra.mxu0 %v66
    %v187 = vpop.f32.mrf.mxu0
    %v188 = vadd.f32 %v99, %v187
    %v189 = vpop.f32.mrf.mxu0
    %190 = vmatprep.mubr.f32.mxu0 0.0
    %191 = vmatmul.mubr.f32.gmra.mxu0 %v67
    %v192 = vpop.f32.mrf.mxu0
    %v193 = vadd.f32 %v99, %v192
    %v194 = vpop.f32.mrf.mxu0
    %195 = vmatprep.mubr.f32.mxu0 0.0
    %196 = vmatmul.mubr.f32.gmra.mxu0 %v68
    %v197 = vpop.f32.mrf.mxu0
    %v198 = vadd.f32 %v99, %v197
    %v199 = vpop.f32.mrf.mxu0
    %200 = vmatprep.mubr.f32.mxu0 0.0
    %201 = vmatmul.mubr.f32.gmra.mxu0 %v69
    %v202 = vpop.f32.mrf.mxu0
    %v203 = vadd.f32 %v99, %v202
    %v204 = vpop.f32.mrf.mxu0
    %205 = vmatprep.mubr.f32.mxu0 0.0
    %206 = vmatmul.mubr.f32.gmra.mxu0 %v70
    %v207 = vpop.f32.mrf.mxu0
    %v208 = vadd.f32 %v99, %v207
    %v209 = vpop.f32.mrf.mxu0
    %210 = vmatprep.mubr.f32.mxu0 0.0
    %211 = vmatmul.mubr.f32.gmra.mxu0 %v71
    %v212 = vpop.f32.mrf.mxu0
    %v213 = vadd.f32 %v99, %v212
    %v214 = vpop.f32.mrf.mxu0
    %215 = vmatprep.mubr.f32.mxu0 0.0
    %216 = vmatmul.mubr.f32.gmra.mxu0 %v72
    %v217 = vpop.f32.mrf.mxu0
    %v218 = vadd.f32 %v99, %v217
    %v219 = vpop.f32.mrf.mxu0
    %220 = vmatprep.mubr.f32.mxu0 0.0
    %221 = vmatmul.mubr.f32.gmra.mxu0 %v73
    %v222 = vpop.f32.mrf.mxu0
    %v223 = vadd.f32 %v99, %v222
    %v224 = vpop.f32.mrf.mxu0
    %225 = vmatprep.mubr.f32.mxu0 0.0
    %226 = vmatmul.mubr.f32.gmra.mxu0 %v74
    %v227 = vpop.f32.mrf.mxu0
    %v228 = vadd.f32 %v99, %v227
    %v229 = vpop.f32.mrf.mxu0
    %230 = vmatprep.mubr.f32.mxu0 0.0
    %231 = vmatmul.mubr.f32.gmra.mxu0 %v75
    %v232 = vpop.f32.mrf.mxu0
    %v233 = vadd.f32 %v99, %v232
    %v234 = vpop.f32.mrf.mxu0
    %235 = vmatprep.mubr.f32.mxu0 0.0
    %236 = vmatmul.mubr.f32.gmra.mxu0 %v76
    %v237 = vpop.f32.mrf.mxu0
    %v238 = vadd.f32 %v99, %v237
    %v239 = vpop.f32.mrf.mxu0
    %240 = vmatprep.mubr.f32.mxu0 0.0
    %241 = vmatmul.mubr.f32.gmra.mxu0 %v77
    %v242 = vpop.f32.mrf.mxu0
    %v243 = vadd.f32 %v99, %v242
    %v244 = vpop.f32.mrf.mxu0
    %245 = vdwg.mxu0
    %v246 = vxor.u32 %v168, 2147483648
    %v247 = vxor.u32 %v173, 2147483648
    %v248 = vxor.u32 %v178, 2147483648
    %v249 = vxor.u32 %v183, 2147483648
    %v250 = vxor.u32 %v188, 2147483648
    %v251 = vxor.u32 %v193, 2147483648
    %v252 = vxor.u32 %v198, 2147483648
    %v253 = vxor.u32 %v203, 2147483648
    %v254 = vxor.u32 %v208, 2147483648
    %v255 = vxor.u32 %v213, 2147483648
    %v256 = vxor.u32 %v218, 2147483648
    %v257 = vxor.u32 %v223, 2147483648
    %v258 = vxor.u32 %v228, 2147483648
    %v259 = vxor.u32 %v233, 2147483648
    %v260 = vxor.u32 %v238, 2147483648
    %v261 = vxor.u32 %v243, 2147483648
    %v262 = vmul.f32 %v246, 1.442695
    %v263 = vpow.pop %v262
    %v264 = vmul.f32 %v247, 1.442695
    %v265 = vpow.pop %v264
    %v266 = vmul.f32 %v248, 1.442695
    %v267 = vpow.pop %v266
    %v268 = vmul.f32 %v249, 1.442695
    %v269 = vpow.pop %v268
    %v270 = vmul.f32 %v250, 1.442695
    %v271 = vpow.pop %v270
    %v272 = vmul.f32 %v251, 1.442695
    %v273 = vpow.pop %v272
    %v274 = vmul.f32 %v252, 1.442695
    %v275 = vpow.pop %v274
    %v276 = vmul.f32 %v253, 1.442695
    %v277 = vpow.pop %v276
    %v278 = vmul.f32 %v254, 1.442695
    %v279 = vpow.pop %v278
    %v280 = vmul.f32 %v255, 1.442695
    %v281 = vpow.pop %v280
    %v282 = vmul.f32 %v256, 1.442695
    %v283 = vpow.pop %v282
    %v284 = vmul.f32 %v257, 1.442695
    %v285 = vpow.pop %v284
    %v286 = vmul.f32 %v258, 1.442695
    %v287 = vpow.pop %v286
    %v288 = vmul.f32 %v259, 1.442695
    %v289 = vpow.pop %v288
    %v290 = vmul.f32 %v260, 1.442695
    %v291 = vpow.pop %v290
    %v292 = vmul.f32 %v261, 1.442695
    %v293 = vpow.pop %v292
    %v294 = vadd.f32 %v263, 1.0
    %v295 = vadd.f32 %v265, 1.0
    %v296 = vadd.f32 %v267, 1.0
    %v297 = vadd.f32 %v269, 1.0
    %v298 = vadd.f32 %v271, 1.0
    %v299 = vadd.f32 %v273, 1.0
    %v300 = vadd.f32 %v275, 1.0
    %v301 = vadd.f32 %v277, 1.0
    %v302 = vadd.f32 %v279, 1.0
    %v303 = vadd.f32 %v281, 1.0
    %v304 = vadd.f32 %v283, 1.0
    %v305 = vadd.f32 %v285, 1.0
    %v306 = vadd.f32 %v287, 1.0
    %v307 = vadd.f32 %v289, 1.0
    %v308 = vadd.f32 %v291, 1.0
    %v309 = vadd.f32 %v293, 1.0
    %v310 = vrcp.pop %v294
    %v311 = vmul.f32 1.0, %v310
    %v312 = vrcp.pop %v295
    %v313 = vmul.f32 1.0, %v312
    %v314 = vrcp.pop %v296
    %v315 = vmul.f32 1.0, %v314
    %v316 = vrcp.pop %v297
    %v317 = vmul.f32 1.0, %v316
    %v318 = vrcp.pop %v298
    %v319 = vmul.f32 1.0, %v318
    %v320 = vrcp.pop %v299
    %v321 = vmul.f32 1.0, %v320
    %v322 = vrcp.pop %v300
    %v323 = vmul.f32 1.0, %v322
    %v324 = vrcp.pop %v301
    %v325 = vmul.f32 1.0, %v324
    %v326 = vrcp.pop %v302
    %v327 = vmul.f32 1.0, %v326
    %v328 = vrcp.pop %v303
    %v329 = vmul.f32 1.0, %v328
    %v330 = vrcp.pop %v304
    %v331 = vmul.f32 1.0, %v330
    %v332 = vrcp.pop %v305
    %v333 = vmul.f32 1.0, %v332
    %v334 = vrcp.pop %v306
    %v335 = vmul.f32 1.0, %v334
    %v336 = vrcp.pop %v307
    %v337 = vmul.f32 1.0, %v336
    %v338 = vrcp.pop %v308
    %v339 = vmul.f32 1.0, %v338
    %v340 = vrcp.pop %v309
    %v341 = vmul.f32 1.0, %v340
    %v342 = vmul.f32 %v168, %v311
    %v343 = vmul.f32 %v173, %v313
    %v344 = vmul.f32 %v178, %v315
    %v345 = vmul.f32 %v183, %v317
    %v346 = vmul.f32 %v188, %v319
    %v347 = vmul.f32 %v193, %v321
    %v348 = vmul.f32 %v198, %v323
    %v349 = vmul.f32 %v203, %v325
    %v350 = vmul.f32 %v208, %v327
    %v351 = vmul.f32 %v213, %v329
    %v352 = vmul.f32 %v218, %v331
    %v353 = vmul.f32 %v223, %v333
    %v354 = vmul.f32 %v228, %v335
    %v355 = vmul.f32 %v233, %v337
    %v356 = vmul.f32 %v238, %v339
    %v357 = vmul.f32 %v243, %v341
    %v358 = vld [vmem:[#allocation7] sm:$0xff]
    %v359 = vld [vmem:[#allocation7 + $0x8] sm:$0xff]
    %v360 = vld [vmem:[#allocation7 + $0x10] sm:$0xff]
    %v361 = vld [vmem:[#allocation7 + $0x18] sm:$0xff]
    %v362 = vld [vmem:[#allocation7 + $0x20] sm:$0xff]
    %v363 = vld [vmem:[#allocation7 + $0x28] sm:$0xff]
    %v364 = vld [vmem:[#allocation7 + $0x30] sm:$0xff]
    %v365 = vld [vmem:[#allocation7 + $0x38] sm:$0xff]
    %v366 = vld [vmem:[#allocation7 + $0x40] sm:$0xff]
    %v367 = vld [vmem:[#allocation7 + $0x48] sm:$0xff]
    %v368 = vld [vmem:[#allocation7 + $0x50] sm:$0xff]
    %v369 = vld [vmem:[#allocation7 + $0x58] sm:$0xff]
    %v370 = vld [vmem:[#allocation7 + $0x60] sm:$0xff]
    %v371 = vld [vmem:[#allocation7 + $0x68] sm:$0xff]
    %v372 = vld [vmem:[#allocation7 + $0x70] sm:$0xff]
    %v373 = vld [vmem:[#allocation7 + $0x78] sm:$0xff]
    %v374 = vld [vmem:[%s4] sm:$0x1]
    %v376 = vlaneseq
    %v377 = vshrl.u32 %v376, 7
    %v378 = vsub.s32 0, %v377
    %v379 = vrot.slane %v374, %v378
    %381 = vmatprep.subr.mxu0 0.0
    %382 = vmatpush1.msra.mxu0 %v373
    %383 = vmatprep.subr.mxu0 0.0
    %384 = vmatpush1.msra.mxu0 %v372
    %385 = vmatprep.subr.mxu0 0.0
    %386 = vmatpush1.msra.mxu0 %v371
    %387 = vmatprep.subr.mxu0 0.0
    %388 = vmatpush1.msra.mxu0 %v370
    %389 = vmatprep.subr.mxu0 0.0
    %390 = vmatpush1.msra.mxu0 %v369
    %391 = vmatprep.subr.mxu0 0.0
    %392 = vmatpush1.msra.mxu0 %v368
    %393 = vmatprep.subr.mxu0 0.0
    %394 = vmatpush1.msra.mxu0 %v367
    %395 = vmatprep.subr.mxu0 0.0
    %396 = vmatpush1.msra.mxu0 %v366
    %397 = vmatprep.subr.mxu0 0.0
    %398 = vmatpush1.msra.mxu0 %v365
    %399 = vmatprep.subr.mxu0 0.0
    %400 = vmatpush1.msra.mxu0 %v364
    %401 = vmatprep.subr.mxu0 0.0
    %402 = vmatpush1.msra.mxu0 %v363
    %403 = vmatprep.subr.mxu0 0.0
    %404 = vmatpush1.msra.mxu0 %v362
    %405 = vmatprep.subr.mxu0 0.0
    %406 = vmatpush1.msra.mxu0 %v361
    %407 = vmatprep.subr.mxu0 0.0
    %408 = vmatpush1.msra.mxu0 %v360
    %409 = vmatprep.subr.mxu0 0.0
    %410 = vmatpush1.msra.mxu0 %v359
    %411 = vmatprep.subr.mxu0 0.0
    %412 = vmatpush1.msra.mxu0 %v358
    %413 = vmatprep.subr.mxu0 0.0
    %414 = vmatpush2.msra.mxu0 0.0
    %415 = vmatprep.subr.mxu0 0.0
    %416 = vmatpush2.msra.mxu0 0.0
    %417 = vmatprep.subr.mxu0 0.0
    %418 = vmatpush2.msra.mxu0 0.0
    %419 = vmatprep.subr.mxu0 0.0
    %420 = vmatpush2.msra.mxu0 0.0
    %421 = vmatprep.subr.mxu0 0.0
    %422 = vmatpush2.msra.mxu0 0.0
    %423 = vmatprep.subr.mxu0 0.0
    %424 = vmatpush2.msra.mxu0 0.0
    %425 = vmatprep.subr.mxu0 0.0
    %426 = vmatpush2.msra.mxu0 0.0
    %427 = vmatprep.subr.mxu0 0.0
    %428 = vmatpush2.msra.mxu0 0.0
    %429 = vmatprep.subr.mxu0 0.0
    %430 = vmatpush2.msra.mxu0 0.0
    %431 = vmatprep.subr.mxu0 0.0
    %432 = vmatpush2.msra.mxu0 0.0
    %433 = vmatprep.subr.mxu0 0.0
    %434 = vmatpush2.msra.mxu0 0.0
    %435 = vmatprep.subr.mxu0 0.0
    %436 = vmatpush2.msra.mxu0 0.0
    %437 = vmatprep.subr.mxu0 0.0
    %438 = vmatpush2.msra.mxu0 0.0
    %439 = vmatprep.subr.mxu0 0.0
    %440 = vmatpush2.msra.mxu0 0.0
    %441 = vmatprep.subr.mxu0 0.0
    %442 = vmatpush2.msra.mxu0 0.0
    %443 = vmatprep.subr.mxu0 0.0
    %444 = vmatpush2.msra.mxu0 0.0
    %445 = vmatprep.mubr.f32.mxu0 0.0
    %446 = vmatmul.mubr.f32.gmra.mxu0 %v342
    %v447 = vpop.f32.mrf.mxu0
    %v448 = vadd.f32 %v379, %v447
    %v449 = vpop.f32.mrf.mxu0
    %450 = vmatprep.mubr.f32.mxu0 0.0
    %451 = vmatmul.mubr.f32.gmra.mxu0 %v343
    %v452 = vpop.f32.mrf.mxu0
    %v453 = vadd.f32 %v379, %v452
    %v454 = vpop.f32.mrf.mxu0
    %455 = vmatprep.mubr.f32.mxu0 0.0
    %456 = vmatmul.mubr.f32.gmra.mxu0 %v344
    %v457 = vpop.f32.mrf.mxu0
    %v458 = vadd.f32 %v379, %v457
    %v459 = vpop.f32.mrf.mxu0
    %460 = vmatprep.mubr.f32.mxu0 0.0
    %461 = vmatmul.mubr.f32.gmra.mxu0 %v345
    %v462 = vpop.f32.mrf.mxu0
    %v463 = vadd.f32 %v379, %v462
    %v464 = vpop.f32.mrf.mxu0
    %465 = vmatprep.mubr.f32.mxu0 0.0
    %466 = vmatmul.mubr.f32.gmra.mxu0 %v346
    %v467 = vpop.f32.mrf.mxu0
    %v468 = vadd.f32 %v379, %v467
    %v469 = vpop.f32.mrf.mxu0
    %470 = vmatprep.mubr.f32.mxu0 0.0
    %471 = vmatmul.mubr.f32.gmra.mxu0 %v347
    %v472 = vpop.f32.mrf.mxu0
    %v473 = vadd.f32 %v379, %v472
    %v474 = vpop.f32.mrf.mxu0
    %475 = vmatprep.mubr.f32.mxu0 0.0
    %476 = vmatmul.mubr.f32.gmra.mxu0 %v348
    %v477 = vpop.f32.mrf.mxu0
    %v478 = vadd.f32 %v379, %v477
    %v479 = vpop.f32.mrf.mxu0
    %480 = vmatprep.mubr.f32.mxu0 0.0
    %481 = vmatmul.mubr.f32.gmra.mxu0 %v349
    %v482 = vpop.f32.mrf.mxu0
    %v483 = vadd.f32 %v379, %v482
    %v484 = vpop.f32.mrf.mxu0
    %485 = vmatprep.mubr.f32.mxu0 0.0
    %486 = vmatmul.mubr.f32.gmra.mxu0 %v350
    %v487 = vpop.f32.mrf.mxu0
    %v488 = vadd.f32 %v379, %v487
    %v489 = vpop.f32.mrf.mxu0
    %490 = vmatprep.mubr.f32.mxu0 0.0
    %491 = vmatmul.mubr.f32.gmra.mxu0 %v351
    %v492 = vpop.f32.mrf.mxu0
    %v493 = vadd.f32 %v379, %v492
    %v494 = vpop.f32.mrf.mxu0
    %495 = vmatprep.mubr.f32.mxu0 0.0
    %496 = vmatmul.mubr.f32.gmra.mxu0 %v352
    %v497 = vpop.f32.mrf.mxu0
    %v498 = vadd.f32 %v379, %v497
    %v499 = vpop.f32.mrf.mxu0
    %500 = vmatprep.mubr.f32.mxu0 0.0
    %501 = vmatmul.mubr.f32.gmra.mxu0 %v353
    %v502 = vpop.f32.mrf.mxu0
    %v503 = vadd.f32 %v379, %v502
    %v504 = vpop.f32.mrf.mxu0
    %505 = vmatprep.mubr.f32.mxu0 0.0
    %506 = vmatmul.mubr.f32.gmra.mxu0 %v354
    %v507 = vpop.f32.mrf.mxu0
    %v508 = vadd.f32 %v379, %v507
    %v509 = vpop.f32.mrf.mxu0
    %510 = vmatprep.mubr.f32.mxu0 0.0
    %511 = vmatmul.mubr.f32.gmra.mxu0 %v355
    %v512 = vpop.f32.mrf.mxu0
    %v513 = vadd.f32 %v379, %v512
    %v514 = vpop.f32.mrf.mxu0
    %515 = vmatprep.mubr.f32.mxu0 0.0
    %516 = vmatmul.mubr.f32.gmra.mxu0 %v356
    %v517 = vpop.f32.mrf.mxu0
    %v518 = vadd.f32 %v379, %v517
    %v519 = vpop.f32.mrf.mxu0
    %520 = vmatprep.mubr.f32.mxu0 0.0
    %521 = vmatmul.mubr.f32.gmra.mxu0 %v357
    %v522 = vpop.f32.mrf.mxu0
    %v523 = vadd.f32 %v379, %v522
    %v524 = vpop.f32.mrf.mxu0
    %525 = vdwg.mxu0
    %526 = vst [vmem:[#allocation8] sm:$0xff] %v448
    %527 = vst [vmem:[#allocation8 + $0x8] sm:$0xff] %v453
    %528 = vst [vmem:[#allocation8 + $0x10] sm:$0xff] %v458
    %529 = vst [vmem:[#allocation8 + $0x18] sm:$0xff] %v463
    %530 = vst [vmem:[#allocation8 + $0x20] sm:$0xff] %v468
    %531 = vst [vmem:[#allocation8 + $0x28] sm:$0xff] %v473
    %532 = vst [vmem:[#allocation8 + $0x30] sm:$0xff] %v478
    %533 = vst [vmem:[#allocation8 + $0x38] sm:$0xff] %v483
    %534 = vst [vmem:[#allocation8 + $0x40] sm:$0xff] %v488
    %535 = vst [vmem:[#allocation8 + $0x48] sm:$0xff] %v493
    %536 = vst [vmem:[#allocation8 + $0x50] sm:$0xff] %v498
    %537 = vst [vmem:[#allocation8 + $0x58] sm:$0xff] %v503
    %538 = vst [vmem:[#allocation8 + $0x60] sm:$0xff] %v508
    %539 = vst [vmem:[#allocation8 + $0x68] sm:$0xff] %v513
    %540 = vst [vmem:[#allocation8 + $0x70] sm:$0xff] %v518
    %541 = vst [vmem:[#allocation8 + $0x78] sm:$0xff] %v523
    // Predicated region
    $region34: #{tpu_custom_call.1} parent=1 // pred_check
      _
    $region35: #{tpu_custom_call.1} parent=1 // pred_check_branch
      %543 = sbr.rel (0) target = $region37
    $region36: #{tpu_custom_call.1} parent=1 // pred_region
      %s545 = ssub.s32 2048, 2048
      %546 = vsyncadd [#allocation4], %s545
      %s547 = sshll.u32 [#allocation8], 4
      %s548 = int_to_ptr.vmem [resolvable:$true] %s547
      %553 = dma.vmem_to_hbm [thread:$0]  %s548, 2048, %s5, [#allocation4], 128, 128, 8
    $region37: #{tpu_custom_call.1} parent=1 // pred_fallthru
      _
    // Predicated region
    $region38: #{tpu_custom_call.1} parent=1 // pred_check
      _
    $region39: #{tpu_custom_call.1} parent=1 // pred_check_branch
      %555 = sbr.rel (0) target = $region41
    $region40: #{tpu_custom_call.1} parent=1 // pred_region
      %556 = dma.done [#allocation4], 2048
    $region41: #{tpu_custom_call.1} parent=1 // pred_fallthru
      _
    %557 = vsyncpa [#allocation3], 1
    %558 = vsyncpa [#allocation6], 1
    %559 = vsyncpa [#allocation4], 1

</llo_original>
